<compile_context>
chip_gen: v7x
topology: tpu7x:2x2x1
jax: 0.10.0
libtpu: 0.0.40
codegen_flags: <defaults>
</compile_context>

<pallas_src>
import functools

import jax
import jax.numpy as jnp
from jax.experimental import pallas as pl
from jax.experimental.pallas import tpu as pltpu


def _basic_conv_kernel(x_ref, w_ref, o_ref, *, neg_slope):
    # x_ref: (1, Ho, K)        one image's pre-gathered rows (kh-major lanes, + ones cols)
    # w_ref: (K, Wo*Cout)      banded weights (bias row folded in)
    # o_ref: (1, Ho, Wo*Cout)  lane-dense output
    acc = jnp.dot(x_ref[0], w_ref[...], preferred_element_type=jnp.float32)
    acc = jnp.where(acc > 0, acc, neg_slope * acc)       # LeakyReLU(0.01)
    o_ref[0] = acc.astype(o_ref.dtype)


def _make_band(weight_oihw, bias, *, h, w, stride, padding, dtype):
    """Block-Toeplitz "banded" weight, built scatter-free (pad/reshape only).

    band[kh*Wp*Cin + (stride*wo + kw)*Cin + ci, wo*Cout + co] = weight[co, ci, kh, kw]
    If bias is given, K is padded to a multiple of 8 and the first extra row holds
    the per-output-column bias (the LHS gets matching constant-ones lanes).
    """
    cout, cin, kh_sz, kw_sz = weight_oihw.shape
    wp = w + 2 * padding
    wo = (w + 2 * padding - kw_sz) // stride + 1
    L = wp * cin                    # rows per kh block
    c = kw_sz * cin                 # dense content length per output column
    d = stride * cin                # row shift per output column

    w2 = jnp.transpose(weight_oihw, (2, 3, 1, 0)).reshape(kh_sz, c, cout)
    a = jnp.broadcast_to(w2[:, None], (kh_sz, wo, c, cout))
    a = jnp.pad(a, ((0, 0), (0, 0), (0, L + d - c), (0, 0)))
    a = a.reshape(kh_sz, wo * (L + d), cout)[:, : wo * L]
    a = a.reshape(kh_sz, wo, L, cout)                       # [kh, wo, row, co]
    band = jnp.transpose(a, (0, 2, 1, 3)).reshape(kh_sz * L, wo * cout)

    if bias is not None:
        base_k = kh_sz * L
        k_total = ((base_k + 1 + 7) // 8) * 8               # pad K to a multiple of 8
        bias_row = jnp.tile(bias.astype(band.dtype), wo)[None, :]
        zero_rows = jnp.zeros((k_total - base_k - 1, wo * cout), band.dtype)
        band = jnp.concatenate([band, bias_row, zero_rows], axis=0)
    return band.astype(dtype)


@functools.partial(
    jax.jit,
    static_argnames=("stride", "padding", "kh_sz", "ho", "wo", "cout",
                     "neg_slope", "compute_dtype"))
def _basic_conv_forward(x_nchw, w_band, *, stride, padding, kh_sz, ho, wo,
                        cout, neg_slope, compute_dtype):
    n, cin, h, w = x_nchw.shape
    hp, wp = h + 2 * padding, w + 2 * padding
    k_band = w_band.shape[0]
    base_k = kh_sz * wp * cin
    k_extra = k_band - base_k            # > 0 iff bias is folded into the band

    # ---- lane-dense input layout (fusible producers: transpose/pad/slice/concat) ----
    x_nhwc = jnp.transpose(x_nchw, (0, 2, 3, 1))
    x_pad = jnp.pad(x_nhwc, ((0, 0), (padding, padding),
                             (padding, padding), (0, 0)))
    x2 = x_pad.reshape(n, hp, wp * cin)                          # (N, Hp, Wp*Cin)
    # Pre-gather the KH vertical taps (stride-decimated rows), kh-major along lanes,
    # so the kernel does a single aligned matmul with no in-kernel slicing.
    taps = [x2[:, kh: kh + stride * (ho - 1) + 1: stride, :]
            for kh in range(kh_sz)]                              # each (N, Ho, Wp*Cin)
    x3 = jnp.concatenate(taps, axis=-1)                          # (N, Ho, KH*Wp*Cin)
    if k_extra > 0:                                              # bias fold: ones lanes
        x3 = jnp.concatenate(
            [x3, jnp.ones((n, ho, k_extra), x3.dtype)], axis=-1)
    x3 = x3.astype(compute_dtype)

    kernel = functools.partial(_basic_conv_kernel, neg_slope=neg_slope)
    out3 = pl.pallas_call(
        kernel,
        out_shape=jax.ShapeDtypeStruct((n, ho, wo * cout), x_nchw.dtype),
        grid_spec=pltpu.PrefetchScalarGridSpec(
            num_scalar_prefetch=0,
            grid=(n,),                                            # per-image steps
            in_specs=[
                pl.BlockSpec((1, ho, k_band), lambda i: (i, 0, 0)),
                pl.BlockSpec((k_band, wo * cout), lambda i: (0, 0)),  # VMEM-resident
            ],
            out_specs=pl.BlockSpec((1, ho, wo * cout), lambda i: (i, 0, 0)),
        ),
        compiler_params=pltpu.CompilerParams(
            dimension_semantics=("parallel",),                    # uses both TCs on v7x
            allow_input_fusion=[True, False],
        ),
    )(x3, w_band)

    # (N, Ho, Wo*Cout) -> (N, Cout, Ho, Wo)
    return jnp.transpose(out3.reshape(n, ho, wo, cout), (0, 3, 1, 2))


class BasicConvPallas:
    """Pallas TPU port of KPAC BasicConv: Conv2d -> LeakyReLU(0.01) (NCHW in/out)."""

    def __init__(self, weight_oihw, bias, *, stride, padding,
                 negative_slope=0.01, compute_dtype=jnp.bfloat16):
        self.weight = jnp.asarray(weight_oihw)
        self.bias = None if bias is None else jnp.asarray(bias)
        self.stride = int(stride)
        self.padding = int(padding)
        self.negative_slope = float(negative_slope)
        self.compute_dtype = compute_dtype
        self._band_cache = {}             # keyed by input (H, W); built once, off hot path

    def _band_for(self, h, w):
        key = (h, w)
        if key not in self._band_cache:
            band = _make_band(self.weight, self.bias, h=h, w=w,
                              stride=self.stride, padding=self.padding,
                              dtype=self.compute_dtype)
            self._band_cache[key] = jax.block_until_ready(band)
        return self._band_cache[key]

    def __call__(self, x_nchw):
        n, cin, h, w = x_nchw.shape
        cout, _, kh_sz, kw_sz = self.weight.shape
        ho = (h + 2 * self.padding - kh_sz) // self.stride + 1
        wo = (w + 2 * self.padding - kw_sz) // self.stride + 1
        band = self._band_for(h, w)
        return _basic_conv_forward(
            x_nchw, band,
            stride=self.stride, padding=self.padding, kh_sz=kh_sz,
            ho=ho, wo=wo, cout=cout, neg_slope=self.negative_slope,
            compute_dtype=self.compute_dtype)


def _reference(x_nchw, weight_oihw, bias, *, stride, padding):
    out = jax.lax.conv_general_dilated(
        x_nchw, weight_oihw,
        window_strides=(stride, stride),
        padding=[(padding, padding), (padding, padding)],
        dimension_numbers=("NCHW", "OIHW", "NCHW"))
    if bias is not None:
        out = out + bias.reshape(1, -1, 1, 1)
    return jnp.where(out > 0, out, 0.01 * out)


if __name__ == "__main__":
    # BasicConv(in_channel=4, out_channel=8, kernel_size=3, stride=1, padding=1, bias=True)
    N, CIN, H, W = 2, 4, 16, 16
    COUT, K, STRIDE, PAD = 8, 3, 1, 1

    key = jax.random.PRNGKey(0)
    kx, kwt, kb = jax.random.split(key, 3)
    x = jax.random.normal(kx, (N, CIN, H, W), dtype=jnp.float32)
    weight = jax.random.normal(kwt, (COUT, CIN, K, K), dtype=jnp.float32) * 0.1
    bias = jax.random.normal(kb, (COUT,), dtype=jnp.float32) * 0.1

    # ---- f32 compute path: exact check of band / layout / bias-fold math ----
    conv_f32 = BasicConvPallas(weight, bias, stride=STRIDE, padding=PAD,
                               compute_dtype=jnp.float32)
    out_f32 = jax.block_until_ready(conv_f32(x))
    ref = _reference(x, weight, bias, stride=STRIDE, padding=PAD)
    assert out_f32.shape == ref.shape == (N, COUT, H, W)
    err_f32 = float(jnp.max(jnp.abs(out_f32 - ref)))
    assert jnp.allclose(out_f32, ref, atol=1e-4, rtol=1e-4), \
        f"f32 mismatch vs reference conv (max_err={err_f32})"

    # ---- default bf16-shipped path: compare against bf16-rounded-operand reference ----
    conv_bf16 = BasicConvPallas(weight, bias, stride=STRIDE, padding=PAD)
    out_bf16 = jax.block_until_ready(conv_bf16(x))
    x_r = x.astype(jnp.bfloat16).astype(jnp.float32)
    w_r = weight.astype(jnp.bfloat16).astype(jnp.float32)
    b_r = bias.astype(jnp.bfloat16).astype(jnp.float32)
    ref_bf = _reference(x_r, w_r, b_r, stride=STRIDE, padding=PAD)
    err_bf = float(jnp.max(jnp.abs(out_bf16 - ref_bf)))
    assert jnp.allclose(out_bf16, ref_bf, atol=1e-2, rtol=1e-2), \
        f"bf16 mismatch vs bf16-rounded reference (max_err={err_bf})"

    print("KERNEL_OK")
</pallas_src>

<mosaic_0001>
module attributes {stable_mosaic.version = 11 : i64} {
  func.func @_basic_conv_kernel(%arg0: i32, %arg1: memref<1x16x224xf32, #tpu.memory_space<vmem>>, %arg2: memref<224x128xf32, #tpu.memory_space<vmem>>, %arg3: memref<1x16x128xf32, #tpu.memory_space<vmem>>) attributes {dimension_semantics = [#tpu.dimension_semantics<parallel>], iteration_bounds = array<i64: 2>, scalar_prefetch = 0 : i64, scratch_operands = 0 : i64, tpu.core_type = #tpu.core_type<tc>, window_params = [{transform_indices = @transform_0, window_bounds = array<i64: 1, 16, 224>}, {pipeline_mode = #tpu.pipeline_mode<synchronous>, transform_indices = @transform_1, window_bounds = array<i64: 224, 128>}, {transform_indices = @transform_2, window_bounds = array<i64: 1, 16, 128>}]} {
    %c0 = arith.constant 0 : index
    %c0_0 = arith.constant 0 : index
    %c0_1 = arith.constant 0 : index
    %0 = vector.load %arg1[%c0, %c0_0, %c0_1] : memref<1x16x224xf32, #tpu.memory_space<vmem>>, vector<1x16x224xf32>
    %1 = vector.shape_cast %0 : vector<1x16x224xf32> to vector<16x224xf32>
    %c0_2 = arith.constant 0 : index
    %c0_3 = arith.constant 0 : index
    %2 = vector.load %arg2[%c0_2, %c0_3] : memref<224x128xf32, #tpu.memory_space<vmem>>, vector<224x128xf32>
    %cst = arith.constant dense<0.000000e+00> : vector<16x128xf32>
    %3 = tpu.matmul %1, %2, %cst {dimension_numbers = #tpu.dot_dimension_numbers<[1], [0], [0], [1], [0, 0, 1, 1], [], []>} : vector<16x224xf32>, vector<224x128xf32>, vector<16x128xf32> -> vector<16x128xf32>
    %cst_4 = arith.constant 0.000000e+00 : f32
    %4 = vector.broadcast %cst_4 : f32 to vector<16x128xf32>
    %5 = arith.cmpf ogt, %3, %4 : vector<16x128xf32>
    %cst_5 = arith.constant 0.00999999977 : f32
    %6 = vector.broadcast %cst_5 : f32 to vector<16x128xf32>
    %7 = arith.mulf %6, %3 : vector<16x128xf32>
    %8 = arith.select %5, %3, %7 : vector<16x128xi1>, vector<16x128xf32>
    %c0_6 = arith.constant 0 : index
    %c0_7 = arith.constant 0 : index
    %c0_8 = arith.constant 0 : index
    %9 = vector.load %arg3[%c0_6, %c0_7, %c0_8] : memref<1x16x128xf32, #tpu.memory_space<vmem>>, vector<1x16x128xf32>
    %10 = vector.shape_cast %9 : vector<1x16x128xf32> to vector<16x128xf32>
    %11 = vector.shape_cast %8 : vector<16x128xf32> to vector<1x16x128xf32>
    tpu.vector_store %arg3[%c0_6, %c0_7, %c0_8], %11 {strides = array<i32>} : memref<1x16x128xf32, #tpu.memory_space<vmem>>, vector<1x16x128xf32>,
    return
  }
  func.func @transform_0(%arg0: i32) -> (i32, i32, i32) {
    %c0_i32 = arith.constant 0 : i32
    %c0_i32_0 = arith.constant 0 : i32
    %c0_i32_1 = arith.constant 0 : i32
    return %arg0, %c0_i32, %c0_i32_0 : i32, i32, i32
  }
  func.func @transform_1(%arg0: i32) -> (i32, i32) {
    %c0_i32 = arith.constant 0 : i32
    %c0_i32_0 = arith.constant 0 : i32
    %c0_i32_1 = arith.constant 0 : i32
    return %c0_i32, %c0_i32_0 : i32, i32
  }
  func.func @transform_2(%arg0: i32) -> (i32, i32, i32) {
    %c0_i32 = arith.constant 0 : i32
    %c0_i32_0 = arith.constant 0 : i32
    %c0_i32_1 = arith.constant 0 : i32
    return %arg0, %c0_i32, %c0_i32_0 : i32, i32, i32
  }
}

</mosaic_0001>

<llo_original>
// kernel: _basic_conv_forward.2
$region0: #{_basic_conv_forward.2}
  #allocation0 [shape = 'u32[]', space=smem, size = 0x4, offset = 0x4, fixed_abs, tag = 'smem constant byte address 0x4 - core index']
  #allocation1 [shape = 'u32[144,128]{1,0:T(1,128)}', space=vmem, size = 0x12000, scoped, tag = 'internal scratch']
  #allocation2 [shape = 'u32[2048]{0}', space=vmem, size = 0x2000, scoped, tag = 'scoped memory for _basic_conv_forward.2']
  #allocation3 [shape = 'u32[2048]{0}', space=vmem, size = 0x2000, scoped, tag = 'scoped memory for _basic_conv_forward.2']
  #allocation4 [shape = 'u32[2048]{0}', space=vmem, size = 0x2000, scoped, tag = 'scoped memory for _basic_conv_forward.2']
  #allocation5 [shape = 'u32[2048]{0}', space=vmem, size = 0x2000, scoped, tag = 'scoped memory for _basic_conv_forward.2']
  #allocation6 [shape = 'u32[2048]{0}', space=vmem, size = 0x2000, scoped, tag = 'scoped memory for _basic_conv_forward.2']
  #allocation7 [shape = 'u32[2048]{0}', space=vmem, size = 0x2000, scoped, tag = 'scoped memory for _basic_conv_forward.2']
  #allocation8 [shape = 'u32[2048]{0}', space=vmem, size = 0x2000, scoped, tag = 'scoped memory for _basic_conv_forward.2']
  #allocation9 [shape = 'u32[2048]{0}', space=vmem, size = 0x2000, scoped, tag = 'scoped memory for _basic_conv_forward.2']
  #allocation10 [shape = 'u32[2048]{0}', space=vmem, size = 0x2000, scoped, tag = 'scoped memory for _basic_conv_forward.2']
  #allocation11 [shape = 'u32[2048]{0}', space=vmem, size = 0x2000, scoped, tag = 'scoped memory for _basic_conv_forward.2']
  #allocation12 [shape = 'u32[2048]{0}', space=vmem, size = 0x2000, scoped, tag = 'scoped memory for _basic_conv_forward.2']
  #allocation13 [shape = 'u32[2048]{0}', space=vmem, size = 0x2000, scoped, tag = 'scoped memory for _basic_conv_forward.2']
  #allocation14 [shape = 'u32[2048]{0}', space=vmem, size = 0x2000, scoped, tag = 'scoped memory for _basic_conv_forward.2']
  #allocation15 [shape = 'u32[2048]{0}', space=vmem, size = 0x2000, scoped, tag = 'scoped memory for _basic_conv_forward.2']
  #allocation16 [shape = 'u32[2048]{0}', space=vmem, size = 0x2000, scoped, tag = 'scoped memory for _basic_conv_forward.2']
  %s0 = inlined_call_operand.vmem [shape: f32[224,128], index: 0, kind: input, shape index: {}]
  %s1 = inlined_call_operand.vmem [shape: f32[2,16,72], index: 1, kind: input, shape index: {}]
  %s2 = inlined_call_operand.<no memory space> [shape: f32[], index: 2, kind: input, shape index: {}]
  %s3 = inlined_call_operand.vmem [shape: f32[2,16,72], index: 3, kind: input, shape index: {}]
  %s4 = inlined_call_operand.vmem [shape: f32[2,16,72], index: 4, kind: input, shape index: {}]
  %s5 = inlined_call_operand.vmem [shape: f32[224], index: 5, kind: input, shape index: {}]
  %s6 = inlined_call_operand.vmem [shape: f32[2,16,128], index: 6, kind: output, shape index: {}]
  %s7 = sld [smem:[#allocation0]]
  $region53: #{_basic_conv_forward.2} parent=0
    _
  %s9 = ssub.s32 1, %s7
  %s10 = scalar_select 0, %s9, %s7
  %v11 = vstv %s2
  %v12 = vstv %s2
  %v13 = vstv %s2
  loop: start=0, step=1, limit=4
  $region2: #{_basic_conv_forward.2} parent=0 // loop_pre_header
    _
  $region3: #{_basic_conv_forward.2} parent=0 // loop_header
    %s15 = sphi 0, %s19
    %p16 = scmp.ge.s32.totalorder %s15, 4
    %s29 = sphi 0, %s31
    %s32 = sphi 0, %s29
    %s33 = sphi 0, %s32
    %s49 = sphi 0, %s33
    %s59 = sphi 0, %s61
    %s62 = sphi 0, %s59
    %s63 = sphi 0, %s62
    %s79 = sphi 0, %s63
    %s85 = sphi 0, %s87
    %s88 = sphi 0, %s85
    %s89 = sphi 0, %s88
    %s105 = sphi 0, %s89
    %s109 = sphi 0, %s109
    %s111 = sphi 0, %s109
    %s112 = sphi 0, %s111
    %s126 = sphi 0, %s112
    %s130 = sphi 0, %s130
    %s132 = sphi 0, %s130
    %s133 = sphi 0, %s132
    %s147 = sphi 0, %s133
    %s153 = sphi 0, %s155
    %s156 = sphi 0, %s153
    %s157 = sphi 0, %s156
    %s173 = sphi 0, %s157
  $region4: #{_basic_conv_forward.2} parent=0 // loop_header_branch
    %18 = sbr.rel (%p16) target = $region8
  $region5: #{_basic_conv_forward.2} parent=0 // loop_body
    %s20 = ssub.s32 %s15, 1
    %s21 = ssub.s32 %s15, 2
    %s22 = sadd.s32 %s15, 1
    %s25 = ssub.s32 %s15, %s22
    %s26 = ssub.s32 0, 0
    %s27 = sor.u32 %s25, %s26
    %p28 = scmp.eq.s32.totalorder %s27, 0
    %s30 = sadd.s32 %s29, 1
    %s31 = scalar_select %p28, %s29, %s30
    %p34 = pneg %p28
    %p35 = scmp.eq.s32.totalorder %s15, 1
    %p36 = por %p34, %p35
    %p37 = scmp.ne.s32.totalorder %s29, %s32
    %p38 = scmp.eq.s32.totalorder %s15, 0
    %p39 = por %p37, %p38
    %p40 = scmp.ne.s32.totalorder %s29, %s32
    %p41 = scmp.eq.s32.totalorder %s20, 1
    %p42 = por %p40, %p41
    %p43 = scmp.ne.s32.totalorder %s32, %s33
    %p44 = scmp.eq.s32.totalorder %s20, 0
    %p45 = por %p43, %p44
    %p46 = scmp.ne.s32.totalorder %s32, %s33
    %p47 = scmp.eq.s32.totalorder %s21, 1
    %p48 = por %p46, %p47
    %p50 = scmp.ne.s32.totalorder %s33, %s49
    %p51 = scmp.eq.s32.totalorder %s21, 0
    %p52 = por %p50, %p51
    %s55 = ssub.s32 %s15, %s22
    %s56 = ssub.s32 0, 0
    %s57 = sor.u32 %s55, %s56
    %p58 = scmp.eq.s32.totalorder %s57, 0
    %s60 = sadd.s32 %s59, 1
    %s61 = scalar_select %p58, %s59, %s60
    %p64 = pneg %p58
    %p65 = scmp.eq.s32.totalorder %s15, 1
    %p66 = por %p64, %p65
    %p67 = scmp.ne.s32.totalorder %s59, %s62
    %p68 = scmp.eq.s32.totalorder %s15, 0
    %p69 = por %p67, %p68
    %p70 = scmp.ne.s32.totalorder %s59, %s62
    %p71 = scmp.eq.s32.totalorder %s20, 1
    %p72 = por %p70, %p71
    %p73 = scmp.ne.s32.totalorder %s62, %s63
    %p74 = scmp.eq.s32.totalorder %s20, 0
    %p75 = por %p73, %p74
    %p76 = scmp.ne.s32.totalorder %s62, %s63
    %p77 = scmp.eq.s32.totalorder %s21, 1
    %p78 = por %p76, %p77
    %p80 = scmp.ne.s32.totalorder %s63, %s79
    %p81 = scmp.eq.s32.totalorder %s21, 0
    %p82 = por %p80, %p81
    %s83 = ssub.s32 %s15, %s22
    %p84 = scmp.eq.s32.totalorder %s83, 0
    %s86 = sadd.s32 %s85, 1
    %s87 = scalar_select %p84, %s85, %s86
    %p90 = pneg %p84
    %p91 = scmp.eq.s32.totalorder %s15, 1
    %p92 = por %p90, %p91
    %p93 = scmp.ne.s32.totalorder %s85, %s88
    %p94 = scmp.eq.s32.totalorder %s15, 0
    %p95 = por %p93, %p94
    %p96 = scmp.ne.s32.totalorder %s85, %s88
    %p97 = scmp.eq.s32.totalorder %s20, 1
    %p98 = por %p96, %p97
    %p99 = scmp.ne.s32.totalorder %s88, %s89
    %p100 = scmp.eq.s32.totalorder %s20, 0
    %p101 = por %p99, %p100
    %p102 = scmp.ne.s32.totalorder %s88, %s89
    %p103 = scmp.eq.s32.totalorder %s21, 1
    %p104 = por %p102, %p103
    %p106 = scmp.ne.s32.totalorder %s89, %s105
    %p107 = scmp.eq.s32.totalorder %s21, 0
    %p108 = por %p106, %p107
    %s110 = sadd.s32 %s109, 1
    %p113 = scmp.eq.s32.totalorder %s15, 1
    %p114 = scmp.ne.s32.totalorder %s109, %s111
    %p115 = scmp.eq.s32.totalorder %s15, 0
    %p116 = por %p114, %p115
    %p117 = scmp.ne.s32.totalorder %s109, %s111
    %p118 = scmp.eq.s32.totalorder %s20, 1
    %p119 = por %p117, %p118
    %p120 = scmp.ne.s32.totalorder %s111, %s112
    %p121 = scmp.eq.s32.totalorder %s20, 0
    %p122 = por %p120, %p121
    %p123 = scmp.ne.s32.totalorder %s111, %s112
    %p124 = scmp.eq.s32.totalorder %s21, 1
    %p125 = por %p123, %p124
    %p127 = scmp.ne.s32.totalorder %s112, %s126
    %p128 = scmp.eq.s32.totalorder %s21, 0
    %p129 = por %p127, %p128
    %s131 = sadd.s32 %s130, 1
    %p134 = scmp.eq.s32.totalorder %s15, 1
    %p135 = scmp.ne.s32.totalorder %s130, %s132
    %p136 = scmp.eq.s32.totalorder %s15, 0
    %p137 = por %p135, %p136
    %p138 = scmp.ne.s32.totalorder %s130, %s132
    %p139 = scmp.eq.s32.totalorder %s20, 1
    %p140 = por %p138, %p139
    %p141 = scmp.ne.s32.totalorder %s132, %s133
    %p142 = scmp.eq.s32.totalorder %s20, 0
    %p143 = por %p141, %p142
    %p144 = scmp.ne.s32.totalorder %s132, %s133
    %p145 = scmp.eq.s32.totalorder %s21, 1
    %p146 = por %p144, %p145
    %p148 = scmp.ne.s32.totalorder %s133, %s147
    %p149 = scmp.eq.s32.totalorder %s21, 0
    %p150 = por %p148, %p149
    %s151 = ssub.s32 %s15, %s22
    %p152 = scmp.eq.s32.totalorder %s151, 0
    %s154 = sadd.s32 %s153, 1
    %s155 = scalar_select %p152, %s153, %s154
    %p158 = pneg %p152
    %p159 = scmp.eq.s32.totalorder %s15, 1
    %p160 = por %p158, %p159
    %p161 = scmp.ne.s32.totalorder %s153, %s156
    %p162 = scmp.eq.s32.totalorder %s15, 0
    %p163 = por %p161, %p162
    %p164 = scmp.ne.s32.totalorder %s153, %s156
    %p165 = scmp.eq.s32.totalorder %s20, 1
    %p166 = por %p164, %p165
    %p167 = scmp.ne.s32.totalorder %s156, %s157
    %p168 = scmp.eq.s32.totalorder %s20, 0
    %p169 = por %p167, %p168
    %p170 = scmp.ne.s32.totalorder %s156, %s157
    %p171 = scmp.eq.s32.totalorder %s21, 1
    %p172 = por %p170, %p171
    %p174 = scmp.ne.s32.totalorder %s157, %s173
    %p175 = scmp.eq.s32.totalorder %s21, 0
    %p176 = por %p174, %p175
    %p177 = scmp.le.s32.totalorder 1, %s15
    %p178 = scmp.lt.s32.totalorder %s15, 3
    %p179 = pnand %p177, %p178
    %p180 = pneg %p179
    // Predicated region
    $region9: #{_basic_conv_forward.2} parent=5 // pred_check
      _
    $region10: #{_basic_conv_forward.2} parent=5 // pred_check_branch
      %182 = sbr.rel (%p179) target = $region12
    $region11: #{_basic_conv_forward.2} parent=5 // pred_region
      %s183 = ssub.s32 %s15, 1
      // Predicated region
      $region13: #{_basic_conv_forward.2} parent=11 // pred_check
        %p184 = pneg %p143
      $region14: #{_basic_conv_forward.2} parent=11 // pred_check_branch
        %186 = sbr.rel (%p184) target = $region16
      $region15: #{_basic_conv_forward.2} parent=11 // pred_region
        _
      $region16: #{_basic_conv_forward.2} parent=11 // pred_fallthru
        _
    $region12: #{_basic_conv_forward.2} parent=5 // pred_fallthru
      _
    %p187 = scmp.lt.s32.totalorder %s15, 2
    // Predicated region
    $region17: #{_basic_conv_forward.2} parent=5 // pred_check
      %p188 = pneg %p187
    $region18: #{_basic_conv_forward.2} parent=5 // pred_check_branch
      %190 = sbr.rel (%p188) target = $region20
    $region19: #{_basic_conv_forward.2} parent=5 // pred_region
      // Predicated region
      $region21: #{_basic_conv_forward.2} parent=19 // pred_check
        %p191 = pneg %p39
      $region22: #{_basic_conv_forward.2} parent=19 // pred_check_branch
        %193 = sbr.rel (%p191) target = $region24
      $region23: #{_basic_conv_forward.2} parent=19 // pred_region
        %s195 = ssub.s32 1, 0
        %s196 = smul.u32 256, %s195
        %p197 = scmp.lt.s32.totalorder %s15, 1
        %s198 = scalar_select %p197, %s15, 1
        %p199 = scmp.lt.s32.totalorder 0, 0
        %s200 = scalar_select %p199, 0, 0
        %s201 = smul.addr %s198, 2
        %s202 = sadd.s32 %s200, %s201
        %s203 = smul.addr %s202, 8
        %s204 = scalar_lea.vmem %s1, %s203
        %s206 = ssub.s32 1, 0
        %s207 = smul.u32 256, %s206
      $region24: #{_basic_conv_forward.2} parent=19 // pred_fallthru
        _
      // Predicated region
      $region25: #{_basic_conv_forward.2} parent=19 // pred_check
        %p208 = pneg %p69
      $region26: #{_basic_conv_forward.2} parent=19 // pred_check_branch
        %210 = sbr.rel (%p208) target = $region28
      $region27: #{_basic_conv_forward.2} parent=19 // pred_region
        %s212 = ssub.s32 1, 0
        %s213 = smul.u32 256, %s212
        %p214 = scmp.lt.s32.totalorder %s15, 1
        %s215 = scalar_select %p214, %s15, 1
        %p216 = scmp.lt.s32.totalorder 0, 0
        %s217 = scalar_select %p216, 0, 0
        %s218 = smul.addr %s215, 2
        %s219 = sadd.s32 %s217, %s218
        %s220 = smul.addr %s219, 8
        %s221 = scalar_lea.vmem %s3, %s220
        %s223 = ssub.s32 1, 0
        %s224 = smul.u32 256, %s223
      $region28: #{_basic_conv_forward.2} parent=19 // pred_fallthru
        _
      // Predicated region
      $region29: #{_basic_conv_forward.2} parent=19 // pred_check
        %p225 = pneg %p95
      $region30: #{_basic_conv_forward.2} parent=19 // pred_check_branch
        %227 = sbr.rel (%p225) target = $region32
      $region31: #{_basic_conv_forward.2} parent=19 // pred_region
        %p228 = scmp.lt.s32.totalorder %s15, 1
        %s229 = scalar_select %p228, %s15, 1
        %s230 = smul.addr %s229, 2
        %s231 = smul.addr %s230, 8
        %s232 = scalar_lea.vmem %s4, %s231
      $region32: #{_basic_conv_forward.2} parent=19 // pred_fallthru
        _
      // Predicated region
      $region33: #{_basic_conv_forward.2} parent=19 // pred_check
        %p233 = pneg %p116
      $region34: #{_basic_conv_forward.2} parent=19 // pred_check_branch
        %235 = sbr.rel (%p233) target = $region36
      $region35: #{_basic_conv_forward.2} parent=19 // pred_region
        _
      $region36: #{_basic_conv_forward.2} parent=19 // pred_fallthru
        _
    $region20: #{_basic_conv_forward.2} parent=5 // pred_fallthru
      _
    %p236 = scmp.le.s32.totalorder 1, %s15
    %p237 = scmp.lt.s32.totalorder %s15, 3
    %p238 = pnand %p236, %p237
    %p239 = pneg %p238
    // Predicated region
    $region37: #{_basic_conv_forward.2} parent=5 // pred_check
      _
    $region38: #{_basic_conv_forward.2} parent=5 // pred_check_branch
      %241 = sbr.rel (%p238) target = $region40
    $region39: #{_basic_conv_forward.2} parent=5 // pred_region
      #allocation17 [shape = 'u8[16384]{0}', space=vmem, size = 0x4000, dematerialized = true, scoped, tag = 'FusionAdapter Buffer %fusion.1 = f32[2,16,224]{2,1,0:T(8,128)} fusion(%param_1.16, %param_2.6, %param_3.6, %param_4.6, %param_5.3), kind=kLoop, calls=%fused_computation.1.clone, metadata={op_name="jit(_basic_conv_forward)/concatenate" stack_frame_id=13}']
      %s242 = ssub.s32 %s15, 1
      %s244 = ssub.s32 1, 0
      %s245 = smul.u32 256, %s244
      %p246 = scmp.lt.s32.totalorder %s20, 1
      %s247 = scalar_select %p246, %s20, 1
      %p248 = scmp.lt.s32.totalorder 0, 0
      %s249 = scalar_select %p248, 0, 0
      %s250 = smul.addr %s247, 2
      %s251 = sadd.s32 %s249, %s250
      %s252 = smul.addr %s251, 8
      %s253 = scalar_lea.vmem %s1, %s252
      %p254 = pneg %p45
      %p255 = pneg %p42
      %s257 = ssub.s32 1, 0
      %s258 = smul.u32 256, %s257
      %p259 = scmp.lt.s32.totalorder %s20, 1
      %s260 = scalar_select %p259, %s20, 1
      %p261 = scmp.lt.s32.totalorder 0, 0
      %s262 = scalar_select %p261, 0, 0
      %s263 = smul.addr %s260, 2
      %s264 = sadd.s32 %s262, %s263
      %s265 = smul.addr %s264, 8
      %s266 = scalar_lea.vmem %s3, %s265
      %p267 = pneg %p75
      %p268 = pneg %p72
      %p269 = scmp.lt.s32.totalorder %s20, 1
      %s270 = scalar_select %p269, %s20, 1
      %s271 = smul.addr %s270, 2
      %s272 = smul.addr %s271, 8
      %s273 = scalar_lea.vmem %s4, %s272
      %p274 = pneg %p101
      %p275 = pneg %p98
      %p276 = pneg %p122
      %p277 = pneg %p119
      %p278 = pneg %p143
      %p279 = pneg %p140
      %p280 = pneg %p169
      %p281 = pneg %p166
      %p282 = scmp.lt.s32.totalorder %s20, 1
      %s283 = scalar_select %p282, %s20, 1
      %s284 = smul.addr %s283, 2
      %s285 = smul.addr %s284, 8
      %s286 = scalar_lea.vmem %s6, %s285
      %s288 = ssub.s32 1, 0
      %s289 = smul.u32 256, %s288
      %p290 = scmp.lt.s32.totalorder %s20, 1
      %s291 = scalar_select %p290, %s20, 1
      %p292 = scmp.lt.s32.totalorder 0, 0
      %s293 = scalar_select %p292, 0, 0
      %s294 = smul.addr %s291, 2
      %s295 = sadd.s32 %s293, %s294
      %s296 = smul.addr %s295, 8
      %s297 = scalar_lea.vmem %s1, %s296
      %s299 = ssub.s32 1, 0
      %s300 = smul.u32 256, %s299
      %s302 = ssub.s32 1, 0
      %s303 = smul.u32 256, %s302
      %p304 = scmp.lt.s32.totalorder %s20, 1
      %s305 = scalar_select %p304, %s20, 1
      %p306 = scmp.lt.s32.totalorder 0, 0
      %s307 = scalar_select %p306, 0, 0
      %s308 = smul.addr %s305, 2
      %s309 = sadd.s32 %s307, %s308
      %s310 = smul.addr %s309, 8
      %s311 = scalar_lea.vmem %s3, %s310
      %s313 = ssub.s32 1, 0
      %s314 = smul.u32 256, %s313
      %p315 = scmp.lt.s32.totalorder %s20, 1
      %s316 = scalar_select %p315, %s20, 1
      %s317 = smul.addr %s316, 2
      %s318 = smul.addr %s317, 8
      %s319 = scalar_lea.vmem %s4, %s318
      %p320 = scmp.lt.s32.totalorder %s20, 1
      %s321 = scalar_select %p320, %s20, 1
      %s322 = smul.addr %s321, 2
      %s323 = smul.addr %s322, 8
      %s324 = scalar_lea.vmem %s6, %s323
      %s325 = ssub.s32 0, 0
      %p326 = scmp.lt.s32.totalorder %s325, 0
      %s327 = scalar_select %p326, 0, 255
      %v328 = vld [vmem:[%s297] sm:%s327]
      %s329 = ssub.s32 0, 0
      %p330 = scmp.lt.s32.totalorder %s329, 0
      %s331 = scalar_select %p330, 0, 255
      %v332 = vld [vmem:[%s311] sm:%s331]
      %v333 = vlaneseq
      %v334 = vand.u32 %v333, 127
      %v335 = vadd.s32 %v334, 128
      %vm336 = vcmp.lt.s32.totalorder %v335, 200
      %v337 = vsel %vm336, %v332, %v12
      %v338 = vlaneseq
      %v339 = vand.u32 %v338, 127
      %vm340 = vcmp.lt.s32.totalorder %v339, 56
      %v341 = vsel %vm340, %v337, %v12
      %342 = vrot.lane.b32.xlu0 %v341, 72
      %v343 = vpop.permute.xlu0 %342
      %v344 = vld [vmem:[%s319] sm:$0xff]
      %v345 = vlaneseq
      %v346 = vand.u32 %v345, 127
      %vm348 = vcmp.lt.s32.totalorder %v346, 72
      %v349 = vsel %vm348, %v344, %v13
      %v350 = vld [vmem:[%s5] ss:$0 sm:$0xff]
      %351 = xla_tuple %v349, %v343
      %352 = xla_tuple %351
      %v353 = vmax.f32 %v349, %v343
      %354 = xla_tuple %v353
      %355 = xla_tuple %v353, %v11
      %356 = xla_tuple %355
      %v357 = vmax.f32 %v353, %v11
      %358 = xla_tuple %v357
      %359 = xla_tuple %v357, %v350
      %360 = xla_tuple %359
      %v361 = vmax.f32 %v357, %v350
      %362 = xla_tuple %v361
      %364 = vst [vmem:[#allocation17] sm:$0xff] %v361
      %v365 = vlaneseq
      %v366 = vand.u32 %v365, 127
      %v367 = vadd.s32 %v366, 256
      %vm368 = vcmp.lt.s32.totalorder %v367, 328
      %v369 = vsel %vm368, %v328, %v11
      %v370 = vlaneseq
      %v371 = vand.u32 %v370, 127
      %vm372 = vcmp.lt.s32.totalorder %v371, 112
      %v373 = vsel %vm372, %v369, %v11
      %374 = vrot.lane.b32.xlu0 %v373, 16
      %v375 = vpop.permute.xlu0 %374
      %v376 = vlaneseq
      %v377 = vand.u32 %v376, 127
      %vm378 = vcmp.lt.s32.totalorder %v377, 56
      %v379 = vsel %vm378, %v12, %v337
      %380 = vrot.lane.b32.xlu0 %v379, 72
      %v381 = vpop.permute.xlu0 %380
      %s382 = scalar_lea.vmem %s5, 1
      %v383 = vld [vmem:[%s382] ss:$0 sm:$0xff]
      %384 = xla_tuple %v13, %v381
      %385 = xla_tuple %384
      %v386 = vmax.f32 %v13, %v381
      %387 = xla_tuple %v386
      %388 = xla_tuple %v386, %v375
      %389 = xla_tuple %388
      %v390 = vmax.f32 %v386, %v375
      %391 = xla_tuple %v390
      %392 = xla_tuple %v390, %v383
      %393 = xla_tuple %392
      %v394 = vmax.f32 %v390, %v383
      %395 = xla_tuple %v394
      %s396 = scalar_lea.vmem [#allocation17], 8
      %398 = vst [vmem:[%s396] sm:$0xff] %v394
      %s399 = scalar_lea.vmem %s297, 8
      %s400 = ssub.s32 0, 0
      %p401 = scmp.lt.s32.totalorder %s400, 0
      %s402 = scalar_select %p401, 0, 255
      %v403 = vld [vmem:[%s399] sm:%s402]
      %s404 = scalar_lea.vmem %s297, 8
      %s405 = scalar_lea.vmem %s311, 8
      %s406 = ssub.s32 0, 0
      %p407 = scmp.lt.s32.totalorder %s406, 0
      %s408 = scalar_select %p407, 0, 255
      %v409 = vld [vmem:[%s405] sm:%s408]
      %s410 = scalar_lea.vmem %s311, 8
      %v411 = vlaneseq
      %v412 = vand.u32 %v411, 127
      %v413 = vadd.s32 %v412, 128
      %vm414 = vcmp.lt.s32.totalorder %v413, 200
      %v415 = vsel %vm414, %v409, %v12
      %v416 = vlaneseq
      %v417 = vand.u32 %v416, 127
      %vm418 = vcmp.lt.s32.totalorder %v417, 56
      %v419 = vsel %vm418, %v415, %v12
      %420 = vrot.lane.b32.xlu0 %v419, 72
      %v421 = vpop.permute.xlu0 %420
      %s422 = scalar_lea.vmem %s319, 8
      %v423 = vld [vmem:[%s422] sm:$0xff]
      %v424 = vlaneseq
      %v425 = vand.u32 %v424, 127
      %vm427 = vcmp.lt.s32.totalorder %v425, 72
      %v428 = vsel %vm427, %v423, %v13
      %429 = xla_tuple %v428, %v421
      %430 = xla_tuple %429
      %v431 = vmax.f32 %v428, %v421
      %432 = xla_tuple %v431
      %433 = xla_tuple %v431, %v11
      %434 = xla_tuple %433
      %v435 = vmax.f32 %v431, %v11
      %436 = xla_tuple %v435
      %437 = xla_tuple %v435, %v350
      %438 = xla_tuple %437
      %v439 = vmax.f32 %v435, %v350
      %440 = xla_tuple %v439
      %s441 = scalar_lea.vmem [#allocation17], 16
      %443 = vst [vmem:[%s441] sm:$0xff] %v439
      %s444 = scalar_lea.vmem %s297, 8
      %v445 = vlaneseq
      %v446 = vand.u32 %v445, 127
      %v447 = vadd.s32 %v446, 256
      %vm448 = vcmp.lt.s32.totalorder %v447, 328
      %v449 = vsel %vm448, %v403, %v11
      %v450 = vlaneseq
      %v451 = vand.u32 %v450, 127
      %vm452 = vcmp.lt.s32.totalorder %v451, 112
      %v453 = vsel %vm452, %v449, %v11
      %454 = vrot.lane.b32.xlu0 %v453, 16
      %v455 = vpop.permute.xlu0 %454
      %s456 = scalar_lea.vmem %s311, 8
      %v457 = vlaneseq
      %v458 = vand.u32 %v457, 127
      %vm459 = vcmp.lt.s32.totalorder %v458, 56
      %v460 = vsel %vm459, %v12, %v415
      %461 = vrot.lane.b32.xlu0 %v460, 72
      %v462 = vpop.permute.xlu0 %461
      %463 = xla_tuple %v13, %v462
      %464 = xla_tuple %463
      %v465 = vmax.f32 %v13, %v462
      %466 = xla_tuple %v465
      %467 = xla_tuple %v465, %v455
      %468 = xla_tuple %467
      %v469 = vmax.f32 %v465, %v455
      %470 = xla_tuple %v469
      %471 = xla_tuple %v469, %v383
      %472 = xla_tuple %471
      %v473 = vmax.f32 %v469, %v383
      %474 = xla_tuple %v473
      %s475 = scalar_lea.vmem [#allocation17], 24
      %477 = vst [vmem:[%s475] sm:$0xff] %v473
      %v478 = vld [vmem:[#allocation17] sm:$0xff]
      %v479 = vld [vmem:[#allocation17 + $0x8] sm:$0xff]
      %v480 = vld [vmem:[#allocation17 + $0x10] sm:$0xff]
      %v481 = vld [vmem:[#allocation17 + $0x18] sm:$0xff]
      %v482 = vld [vmem:[%s0] sm:$0xff]
      %v483 = vld [vmem:[%s0 + $0x8] sm:$0xff]
      %v484 = vld [vmem:[%s0 + $0x10] sm:$0xff]
      %v485 = vld [vmem:[%s0 + $0x18] sm:$0xff]
      %v486 = vld [vmem:[%s0 + $0x20] sm:$0xff]
      %v487 = vld [vmem:[%s0 + $0x28] sm:$0xff]
      %v488 = vld [vmem:[%s0 + $0x30] sm:$0xff]
      %v489 = vld [vmem:[%s0 + $0x38] sm:$0xff]
      %v490 = vld [vmem:[%s0 + $0x40] sm:$0xff]
      %v491 = vld [vmem:[%s0 + $0x48] sm:$0xff]
      %v492 = vld [vmem:[%s0 + $0x50] sm:$0xff]
      %v493 = vld [vmem:[%s0 + $0x58] sm:$0xff]
      %v494 = vld [vmem:[%s0 + $0x60] sm:$0xff]
      %v495 = vld [vmem:[%s0 + $0x68] sm:$0xff]
      %v496 = vld [vmem:[%s0 + $0x70] sm:$0xff]
      %v497 = vld [vmem:[%s0 + $0x78] sm:$0xff]
      %v498 = vld [vmem:[%s0 + $0x80] sm:$0xff]
      %v499 = vld [vmem:[%s0 + $0x88] sm:$0xff]
      %v500 = vld [vmem:[%s0 + $0x90] sm:$0xff]
      %v501 = vld [vmem:[%s0 + $0x98] sm:$0xff]
      %v502 = vld [vmem:[%s0 + $0xa0] sm:$0xff]
      %v503 = vld [vmem:[%s0 + $0xa8] sm:$0xff]
      %v504 = vld [vmem:[%s0 + $0xb0] sm:$0xff]
      %v505 = vld [vmem:[%s0 + $0xb8] sm:$0xff]
      %v506 = vld [vmem:[%s0 + $0xc0] sm:$0xff]
      %v507 = vld [vmem:[%s0 + $0xc8] sm:$0xff]
      %v508 = vld [vmem:[%s0 + $0xd0] sm:$0xff]
      %v509 = vld [vmem:[%s0 + $0xd8] sm:$0xff]
      %vm510 = vcmask 785408
      %v512 = vsel %vm510, %v479, 0
      %v515 = vsel %vm510, %v481, 0
      %517 = vmatprep.subr.mxu0 0.0
      %518 = vmatpush1.msra.mxu0 %v482
      %519 = vmatprep.subr.mxu0 0.0
      %520 = vmatpush1.msra.mxu0 %v483
      %521 = vmatprep.subr.mxu0 0.0
      %522 = vmatpush1.msra.mxu0 %v484
      %523 = vmatprep.subr.mxu0 0.0
      %524 = vmatpush1.msra.mxu0 %v485
      %525 = vmatprep.subr.mxu0 0.0
      %526 = vmatpush1.msra.mxu0 %v486
      %527 = vmatprep.subr.mxu0 0.0
      %528 = vmatpush1.msra.mxu0 %v487
      %529 = vmatprep.subr.mxu0 0.0
      %530 = vmatpush1.msra.mxu0 %v488
      %531 = vmatprep.subr.mxu0 0.0
      %532 = vmatpush1.msra.mxu0 %v489
      %533 = vmatprep.subr.mxu0 0.0
      %534 = vmatpush1.msra.mxu0 %v490
      %535 = vmatprep.subr.mxu0 0.0
      %536 = vmatpush1.msra.mxu0 %v491
      %537 = vmatprep.subr.mxu0 0.0
      %538 = vmatpush1.msra.mxu0 %v492
      %539 = vmatprep.subr.mxu0 0.0
      %540 = vmatpush1.msra.mxu0 %v493
      %541 = vmatprep.subr.mxu0 0.0
      %542 = vmatpush1.msra.mxu0 %v494
      %543 = vmatprep.subr.mxu0 0.0
      %544 = vmatpush1.msra.mxu0 %v495
      %545 = vmatprep.subr.mxu0 0.0
      %546 = vmatpush1.msra.mxu0 %v496
      %547 = vmatprep.subr.mxu0 0.0
      %548 = vmatpush1.msra.mxu0 %v497
      %549 = vmatprep.subr.mxu0 0.0
      %550 = vmatpush1.msra.mxu0 %v498
      %551 = vmatprep.subr.mxu0 0.0
      %552 = vmatpush1.msra.mxu0 %v499
      %553 = vmatprep.subr.mxu0 0.0
      %554 = vmatpush1.msra.mxu0 %v500
      %555 = vmatprep.subr.mxu0 0.0
      %556 = vmatpush1.msra.mxu0 %v501
      %557 = vmatprep.subr.mxu0 0.0
      %558 = vmatpush1.msra.mxu0 %v502
      %559 = vmatprep.subr.mxu0 0.0
      %560 = vmatpush1.msra.mxu0 %v503
      %561 = vmatprep.subr.mxu0 0.0
      %562 = vmatpush1.msra.mxu0 %v504
      %563 = vmatprep.subr.mxu0 0.0
      %564 = vmatpush1.msra.mxu0 %v505
      %565 = vmatprep.subr.mxu0 0.0
      %566 = vmatpush1.msra.mxu0 %v506
      %567 = vmatprep.subr.mxu0 0.0
      %568 = vmatpush1.msra.mxu0 %v507
      %569 = vmatprep.subr.mxu0 0.0
      %570 = vmatpush1.msra.mxu0 %v508
      %571 = vmatprep.subr.mxu0 0.0
      %572 = vmatpush1.msra.mxu0 %v509
      %573 = vmatprep.subr.mxu0 0.0
      %574 = vmatpush1.msra.mxu0 0.0
      %575 = vmatprep.subr.mxu0 0.0
      %576 = vmatpush1.msra.mxu0 0.0
      %577 = vmatprep.subr.mxu0 0.0
      %578 = vmatpush1.msra.mxu0 0.0
      %579 = vmatprep.subr.mxu0 0.0
      %580 = vmatpush1.msra.mxu0 0.0
      %581 = vmatprep.mubr.f32.mxu0 %v512
      %582 = vmatmul.mubr.f32.gmra.mrb[0].mxu0 %v478
      %v583 = vpop.f32.mrb[0].mxu0
      %v584 = vadd.f32 0.0, %v583
      %v585 = vpop.f32.mrb[0].mxu0
      %586 = vmatprep.mubr.f32.mxu0 %v515
      %587 = vmatmul.mubr.f32.gmra.mrb[0].mxu0 %v480
      %v588 = vpop.f32.mrb[0].mxu0
      %v589 = vadd.f32 0.0, %v588
      %v590 = vpop.f32.mrb[0].mxu0
      %591 = vdwg.mxu0
      %vm592 = vcmp.gt.f32.partialorder %v584, 0.0
      %vm593 = vcmp.gt.f32.partialorder %v589, 0.0
      %v594 = vmul.f32 %v584, 0.01
      %v595 = vmul.f32 %v589, 0.01
      %v596 = vsel %vm592, %v584, %v594
      %v597 = vsel %vm593, %v589, %v595
      %598 = vst [vmem:[%s324] sm:$0xff] %v596
      %599 = vst [vmem:[%s324 + $0x8] sm:$0xff] %v597
      %p600 = scmp.lt.s32.totalorder %s20, 1
      %s601 = scalar_select %p600, %s20, 1
      %s602 = smul.addr %s601, 2
      %s603 = smul.addr %s602, 8
      %s604 = scalar_lea.vmem %s6, %s603
      // Predicated region
      $region41: #{_basic_conv_forward.2} parent=39 // pred_check
        %p605 = pneg %p166
      $region42: #{_basic_conv_forward.2} parent=39 // pred_check_branch
        %607 = sbr.rel (%p605) target = $region44
      $region43: #{_basic_conv_forward.2} parent=39 // pred_region
        _
      $region44: #{_basic_conv_forward.2} parent=39 // pred_fallthru
        _
    $region40: #{_basic_conv_forward.2} parent=5 // pred_fallthru
      _
    %p608 = scmp.le.s32.totalorder 2, %s15
    // Predicated region
    $region45: #{_basic_conv_forward.2} parent=5 // pred_check
      %p609 = pneg %p608
    $region46: #{_basic_conv_forward.2} parent=5 // pred_check_branch
      %611 = sbr.rel (%p609) target = $region48
    $region47: #{_basic_conv_forward.2} parent=5 // pred_region
      %s612 = ssub.s32 %s15, 2
      // Predicated region
      $region49: #{_basic_conv_forward.2} parent=47 // pred_check
        %p613 = pneg %p172
      $region50: #{_basic_conv_forward.2} parent=47 // pred_check_branch
        %615 = sbr.rel (%p613) target = $region52
      $region51: #{_basic_conv_forward.2} parent=47 // pred_region
        %p616 = scmp.lt.s32.totalorder %s21, 1
        %s617 = scalar_select %p616, %s21, 1
        %s618 = smul.addr %s617, 2
        %s619 = smul.addr %s618, 8
        %s620 = scalar_lea.vmem %s6, %s619
      $region52: #{_basic_conv_forward.2} parent=47 // pred_fallthru
        _
    $region48: #{_basic_conv_forward.2} parent=5 // pred_fallthru
      _
  $region6: #{_basic_conv_forward.2} parent=0 // loop_footer
    %s19 = sadd.s32 1, %s15
  $region7: #{_basic_conv_forward.2} parent=0 // loop_footer_branch
    %14 = sbr.rel target = $region3
  $region8: #{_basic_conv_forward.2} parent=0 // loop_exit
    _

</llo_original>
